<compile_context>
chip_gen: v7x
topology: tpu7x:2x2x1
jax: 0.10.0
libtpu: 0.0.40
codegen_flags: <defaults>
</compile_context>

<pallas_src>
import functools
import re

import jax
import jax.numpy as jnp
from jax.experimental import pallas as pl
from jax.experimental.pallas import tpu as pltpu

MIB = 1024 * 1024


def _round_up(x, m):
    return (x + m - 1) // m * m


def _tpu_generation():
    """Best-effort TPU generation (5 = v5e/v5p, 6 = v6e, 7 = v7x); -1 unknown."""
    try:
        kind = jax.devices()[0].device_kind.lower()
    except Exception:
        return -1
    m = re.search(r"v(\d+)", kind)
    return int(m.group(1)) if m else -1


_TPU_GEN = _tpu_generation()
# bf16 tanh only where the EUP/VPU are bf16-capable (v6e, v7x).
_COMPUTE_DTYPE = jnp.bfloat16 if _TPU_GEN >= 6 else jnp.float32


def _choose_tiling(B, Td, Te, H, cd_bytes, gen):
    """Generation-aware tile / chunk / VMEM-limit selection (static Python)."""
    te_pad = _round_up(Te, 128)

    # v5e/v6e: 128 MiB VMEM;  v7x (and unknown): 64 MiB;  older: conservative.
    if gen in (5, 6):
        chunk_budget, vmem_cap = 32 * MIB, 112 * MIB
    elif gen >= 7 or gen < 0:
        chunk_budget, vmem_cap = 16 * MIB, 56 * MIB
    else:
        chunk_budget, vmem_cap = 8 * MIB, 32 * MIB

    # Live bytes per energy-chunk element: hp lane-broadcast + tanh energy
    # (compute dtype) + the f32 (energy * v) product.
    per_elem = 2 * cd_bytes + 4

    # Largest lane chunk in {512, 256, 128} dividing te_pad that still allows
    # at least an 8-row decoder tile within the chunk budget.
    te_chunk = 128
    for cand in (512, 256):
        if te_pad % cand == 0 and 8 * H * cand * per_elem <= chunk_budget:
            te_chunk = cand
            break

    tile_td = chunk_budget // max(1, H * te_chunk * per_elem)
    tile_td = max(8, min(256, (tile_td // 8) * 8))
    tile_td = min(tile_td, _round_up(Td, 8))

    # v7x has 2 TensorCores: make sure the parallel grid has >= 2 steps for
    # decode-like shapes (B == 1, Td small).
    # TODO(synk): a Te-split + cross-core combine would also cover B==1, Td<=8.
    if gen >= 7 and B * (_round_up(Td, tile_td) // tile_td) < 2 and Td > 8:
        tile_td = max(8, _round_up((Td + 1) // 2, 8))

    td_pad = _round_up(Td, tile_td)

    # If even an 8-row tile blows the chunk budget (very large H), sub-block H
    # and accumulate the v-weighted sum in f32.
    h_blk = H
    if tile_td * H * te_chunk * per_elem > chunk_budget:
        h_blk = chunk_budget // max(1, tile_td * te_chunk * per_elem)
        h_blk = min(H, max(8, (h_blk // 8) * 8))

    # ept residency: its block index depends only on the batch grid axis, so
    # single-buffer large blocks (one stall per batch, negligible).
    ept_block = H * te_pad * cd_bytes
    ept_bufs = 1 if ept_block > 4 * MIB else 2

    # Derive the VMEM limit from the actual buffers (with headroom), capped
    # under the physical capacity of the target generation.
    needed = (2 * tile_td * H * cd_bytes                  # hp, double-buffered
              + ept_bufs * ept_block                      # encoder projection
              + 2 * tile_td * te_pad * 4                  # output, double-buffered
              + tile_td * te_chunk * (H * cd_bytes        # hoisted hp broadcast
                                      + h_blk * cd_bytes  # tanh energy chunk
                                      + h_blk * 4)        # f32 (energy*v) product
              + 2 * tile_td * te_pad * 4                  # softmax temporaries
              + MIB)
    vmem_limit = int(min(vmem_cap, max(32 * MIB, 2 * needed)))

    return dict(te_pad=te_pad, td_pad=td_pad, tile_td=tile_td,
                te_chunk=te_chunk, h_blk=h_blk, ept_bufs=ept_bufs,
                vmem_limit_bytes=vmem_limit)


def _attn_softmax_kernel(hp_ref, ept_ref, v_ref, o_ref, *,
                         te_valid, te_chunk, h_blk):
    """One (batch, decoder-tile) grid step.

    hp_ref : [1, tile_td, H]      decoder projection (h @ W1^T), compute dtype
    ept_ref: [1, H, te_pad]       encoder projection + bias, transposed, compute dtype
    v_ref  : [H, 1]               f32 score vector
    o_ref  : [1, tile_td, te_pad] f32 output; reused as the raw-score buffer
    """
    _, tile_td, H = hp_ref.shape
    te_pad = o_ref.shape[-1]
    n_chunks = te_pad // te_chunk
    n_hblk = -(-H // h_blk)

    hp = hp_ref[0]                         # [tile_td, H]
    v = v_ref[...].astype(jnp.float32)     # [H, 1]
    ept = ept_ref.at[0]                    # Ref view [H, te_pad]   (no load)
    out = o_ref.at[0]                      # Ref view [tile_td, te_pad]

    # Hoist the lane-broadcast of hp out of the Te-chunk loop (JAX does not
    # CSE broadcast_in_dim), when H is not sub-blocked.
    if n_hblk == 1:
        hp_b = jnp.broadcast_to(hp[:, :, None], (tile_td, H, te_chunk))

    def score_chunk(lo):
        ept_c = ept[:, pl.ds(lo, te_chunk)]                # [H, te_chunk]
        if n_hblk == 1:
            # tanh in compute dtype (bf16 on v6e/v7x); accumulate in f32.
            energy = jnp.tanh(hp_b + ept_c[None, :, :])    # [tile_td, H, te_chunk]
            sc = jnp.sum(energy.astype(jnp.float32) * v[None, :, :], axis=1)
        else:
            sc = jnp.zeros((tile_td, te_chunk), jnp.float32)
            for hb in range(n_hblk):                       # static, small
                h0 = hb * h_blk
                h1 = min(H, h0 + h_blk)
                e = jnp.tanh(hp[:, h0:h1, None] + ept_c[None, h0:h1, :])
                sc = sc + jnp.sum(e.astype(jnp.float32) * v[None, h0:h1, :],
                                  axis=1)
        out[:, pl.ds(lo, te_chunk)] = sc                   # raw scores (f32)

    if n_chunks <= 4:
        for c in range(n_chunks):                          # static unroll
            score_chunk(c * te_chunk)
    else:
        @pl.loop(0, n_chunks)                              # bounded live ranges
        def _(c):
            score_chunk(pl.multiple_of(c * te_chunk, te_chunk))

    scores = out[...]                                      # [tile_td, te_pad]

    # Mask padded encoder positions so they get zero attention weight.
    if te_valid != te_pad:
        lane = jax.lax.broadcasted_iota(jnp.int32, scores.shape, 1)
        scores = jnp.where(lane < te_valid, scores, jnp.float32(-1e30))

    # Numerically-stable softmax over the encoder axis; exact normalization.
    m = jnp.max(scores, axis=-1, keepdims=True)
    ex = jnp.exp(scores - m)
    denom = jnp.sum(ex, axis=-1, keepdims=True)
    out[...] = ex / denom


@jax.jit
def attn_concat(hiddens, encoder_outputs, w, b, v):
    """Pallas port of Attn(method='concat').forward.

    hiddens:          [B, Td, H] float32
    encoder_outputs:  [B, Te, H] float32
    w:                [H, 2H]    nn.Linear(2H, H) weight
    b:                [H]        nn.Linear bias
    v:                [H]        learned vector
    returns:          [B, Td, Te] float32 softmax attention weights
    """
    B, Td, H = hiddens.shape
    _, Te, _ = encoder_outputs.shape

    w1 = w[:, :H]                       # acts on decoder hidden
    w2 = w[:, H:]                       # acts on encoder output

    # Hoisted Linear projections: f32 GEMMs, tiny vs the O(Td*Te*H) kernel
    # work.  Encoder projection is emitted already transposed ([B, H, Te]);
    # the bias is folded in once here (in f32, before any downcast).
    hp = jnp.einsum("bth,oh->bto", hiddens, w1,
                    preferred_element_type=jnp.float32)            # [B, Td, H]
    ept = jnp.einsum("bth,oh->bot", encoder_outputs, w2,
                     preferred_element_type=jnp.float32)           # [B, H, Te]
    ept = ept + b.astype(jnp.float32)[None, :, None]

    cd = _COMPUTE_DTYPE
    hp = hp.astype(cd)
    ept = ept.astype(cd)

    cfg = _choose_tiling(B, Td, Te, H, jnp.dtype(cd).itemsize, _TPU_GEN)
    tile_td, te_chunk, h_blk = cfg["tile_td"], cfg["te_chunk"], cfg["h_blk"]
    td_pad, te_pad = cfg["td_pad"], cfg["te_pad"]

    hp = jnp.pad(hp, ((0, 0), (0, td_pad - Td), (0, 0)))
    ept = jnp.pad(ept, ((0, 0), (0, 0), (0, te_pad - Te)))
    v_col = v.reshape(H, 1).astype(jnp.float32)

    grid = (B, td_pad // tile_td)

    kernel = functools.partial(_attn_softmax_kernel,
                               te_valid=Te, te_chunk=te_chunk, h_blk=h_blk)

    # ept's block index only depends on the batch axis; single-buffer it when
    # it is large (matters most on v7x's 64 MiB VMEM).
    ept_map = lambda bi, ti: (bi, 0, 0)
    ept_spec = pl.BlockSpec((1, H, te_pad), ept_map)
    if cfg["ept_bufs"] == 1 and hasattr(pl, "Buffered"):
        try:
            ept_spec = pl.BlockSpec((1, H, te_pad), ept_map,
                                    pipeline_mode=pl.Buffered(1))
        except TypeError:
            pass

    # This kernel is transcendental-bound (tanh over Td*Te*H + exp over Td*Te).
    cost = pl.CostEstimate(
        flops=3 * B * td_pad * te_pad * H + 5 * B * td_pad * te_pad,
        transcendentals=B * td_pad * te_pad * H + B * td_pad * te_pad,
        bytes_accessed=((B * td_pad * H + B * H * te_pad) * jnp.dtype(cd).itemsize
                        + 4 * (H + B * td_pad * te_pad)),
    )

    out = pl.pallas_call(
        kernel,
        out_shape=jax.ShapeDtypeStruct((B, td_pad, te_pad), jnp.float32),
        grid_spec=pltpu.PrefetchScalarGridSpec(
            num_scalar_prefetch=0,
            grid=grid,
            in_specs=[
                pl.BlockSpec((1, tile_td, H), lambda bi, ti: (bi, ti, 0)),  # hp
                ept_spec,                                                   # ep^T
                pl.BlockSpec((H, 1), lambda bi, ti: (0, 0)),                # v
            ],
            out_specs=pl.BlockSpec((1, tile_td, te_pad),
                                   lambda bi, ti: (bi, ti, 0)),
        ),
        compiler_params=pltpu.CompilerParams(
            dimension_semantics=("parallel", "parallel"),
            vmem_limit_bytes=cfg["vmem_limit_bytes"],
        ),
        cost_estimate=cost,
    )(hp, ept, v_col)

    return out[:, :Td, :Te]


def _reference(hiddens, encoder_outputs, w, b, v):
    """Pure-JAX replica of the PyTorch forward (concat method), for checking."""
    B, Td, H = hiddens.shape
    Te = encoder_outputs.shape[1]
    h_exp = jnp.broadcast_to(hiddens[:, :, None, :], (B, Td, Te, H))
    e_exp = jnp.broadcast_to(encoder_outputs[:, None, :, :], (B, Td, Te, H))
    cat = jnp.concatenate([h_exp, e_exp], axis=-1)            # [B, Td, Te, 2H]
    energy = jnp.tanh(jnp.einsum("btex,hx->bteh", cat, w) + b)
    scores = jnp.sum(v * energy, axis=-1)                     # [B, Td, Te]
    return jax.nn.softmax(scores, axis=-1)


if __name__ == "__main__":
    B, Td, Te, H = 2, 4, 8, 32

    key = jax.random.PRNGKey(0)
    k_h, k_e, k_w, k_b, k_v = jax.random.split(key, 5)

    hiddens = jax.random.normal(k_h, (B, Td, H), dtype=jnp.float32)
    encoder_outputs = jax.random.normal(k_e, (B, Te, H), dtype=jnp.float32)

    # Deterministic parameter init (nn.Linear(2H, H) weight/bias + v vector).
    bound = 1.0 / jnp.sqrt(2.0 * H)
    w = jax.random.uniform(k_w, (H, 2 * H), minval=-bound, maxval=bound,
                           dtype=jnp.float32)
    b = jax.random.uniform(k_b, (H,), minval=-bound, maxval=bound,
                           dtype=jnp.float32)
    v = jax.random.normal(k_v, (H,), dtype=jnp.float32) * 0.1

    out = attn_concat(hiddens, encoder_outputs, w, b, v)
    out = jax.block_until_ready(out)

    ref = _reference(hiddens, encoder_outputs, w, b, v)
    assert out.shape == (B, Td, Te)
    # Exact normalization: rows sum to 1 (f32 rounding only).
    assert jnp.allclose(jnp.sum(out, axis=-1), 1.0, atol=1e-4)
    # Tolerance widened when the bf16 tanh path is active (v6e / v7x).
    tol = 2.5e-2 if _COMPUTE_DTYPE == jnp.bfloat16 else 2e-3
    assert jnp.allclose(out, ref, atol=tol, rtol=tol)

    print("KERNEL_OK")
</pallas_src>

<mosaic_0001>
module attributes {stable_mosaic.version = 11 : i64} {
  func.func @_attn_softmax_kernel(%arg0: i32, %arg1: i32, %arg2: memref<1x8x32xf32, #tpu.memory_space<vmem>>, %arg3: memref<1x32x128xf32, #tpu.memory_space<vmem>>, %arg4: memref<32x1xf32, #tpu.memory_space<vmem>>, %arg5: memref<1x8x128xf32, #tpu.memory_space<vmem>>) attributes {dimension_semantics = [#tpu.dimension_semantics<parallel>, #tpu.dimension_semantics<parallel>], iteration_bounds = array<i64: 2, 1>, scalar_prefetch = 0 : i64, scratch_operands = 0 : i64, tpu.core_type = #tpu.core_type<tc>, window_params = [{transform_indices = @transform_0, window_bounds = array<i64: 1, 8, 32>}, {transform_indices = @transform_1, window_bounds = array<i64: 1, 32, 128>}, {pipeline_mode = #tpu.pipeline_mode<synchronous>, transform_indices = @transform_2, window_bounds = array<i64: 32, 1>}, {transform_indices = @transform_3, window_bounds = array<i64: 1, 8, 128>}]} {
    %c0 = arith.constant 0 : index
    %c0_0 = arith.constant 0 : index
    %c0_1 = arith.constant 0 : index
    %0 = vector.load %arg2[%c0, %c0_0, %c0_1] : memref<1x8x32xf32, #tpu.memory_space<vmem>>, vector<1x8x32xf32>
    %1 = vector.shape_cast %0 : vector<1x8x32xf32> to vector<8x32xf32>
    %c0_2 = arith.constant 0 : index
    %c0_3 = arith.constant 0 : index
    %2 = vector.load %arg4[%c0_2, %c0_3] : memref<32x1xf32, #tpu.memory_space<vmem>>, vector<32x1xf32>
    %3 = vector.shape_cast %1 : vector<8x32xf32> to vector<8x32x1xf32>
    %4 = vector.shape_cast %3 : vector<8x32x1xf32> to vector<8x32x1xf32>
    %5 = vector.broadcast %4 : vector<8x32x1xf32> to vector<8x32x128xf32>
    %c0_i32 = arith.constant 0 : i32
    %c0_i32_4 = arith.constant 0 : i32
    %c0_i32_5 = arith.constant 0 : i32
    %6 = tpu.memref_slice %arg3[%c0_i32, %c0_i32_4, %c0_i32_5] : memref<1x32x128xf32, #tpu.memory_space<vmem>> -> memref<1x32x128xf32, #tpu.memory_space<vmem>>
    %7 = tpu.memref_squeeze %6 : memref<1x32x128xf32, #tpu.memory_space<vmem>> -> memref<32x128xf32, #tpu.memory_space<vmem>>
    %c0_6 = arith.constant 0 : index
    %c0_7 = arith.constant 0 : index
    %8 = vector.load %7[%c0_6, %c0_7] : memref<32x128xf32, #tpu.memory_space<vmem>>, vector<32x128xf32>
    %9 = vector.shape_cast %8 : vector<32x128xf32> to vector<1x32x128xf32>
    %10 = vector.broadcast %9 : vector<1x32x128xf32> to vector<8x32x128xf32>
    %11 = arith.addf %5, %10 : vector<8x32x128xf32>
    %12 = math.tanh %11 : vector<8x32x128xf32>
    %13 = vector.shape_cast %2 : vector<32x1xf32> to vector<1x32x1xf32>
    %14 = vector.broadcast %13 : vector<1x32x1xf32> to vector<8x32x128xf32>
    %15 = arith.mulf %12, %14 : vector<8x32x128xf32>
    %cst = arith.constant dense<0.000000e+00> : vector<8x128xf32>
    %16 = vector.multi_reduction <add>, %15, %cst [1] : vector<8x32x128xf32> to vector<8x128xf32>
    %c0_i32_8 = arith.constant 0 : i32
    %c0_i32_9 = arith.constant 0 : i32
    %c0_i32_10 = arith.constant 0 : i32
    %17 = tpu.memref_slice %arg5[%c0_i32_8, %c0_i32_9, %c0_i32_10] : memref<1x8x128xf32, #tpu.memory_space<vmem>> -> memref<1x8x128xf32, #tpu.memory_space<vmem>>
    %18 = tpu.memref_squeeze %17 : memref<1x8x128xf32, #tpu.memory_space<vmem>> -> memref<8x128xf32, #tpu.memory_space<vmem>>
    %c0_11 = arith.constant 0 : index
    %c0_12 = arith.constant 0 : index
    %19 = vector.load %18[%c0_11, %c0_12] : memref<8x128xf32, #tpu.memory_space<vmem>>, vector<8x128xf32>
    tpu.vector_store %18[%c0_11, %c0_12], %16 {strides = array<i32>} : memref<8x128xf32, #tpu.memory_space<vmem>>, vector<8x128xf32>,
    %c0_13 = arith.constant 0 : index
    %c0_14 = arith.constant 0 : index
    %c0_15 = arith.constant 0 : index
    %20 = vector.load %arg5[%c0_13, %c0_14, %c0_15] : memref<1x8x128xf32, #tpu.memory_space<vmem>>, vector<1x8x128xf32>
    %21 = vector.shape_cast %20 : vector<1x8x128xf32> to vector<8x128xf32>
    %22 = tpu.iota {dimensions = array<i32: 1>} : vector<8x128xi32>
    %c8_i32 = arith.constant 8 : i32
    %23 = vector.broadcast %c8_i32 : i32 to vector<8x128xi32>
    %24 = arith.cmpi slt, %22, %23 : vector<8x128xi32>
    %cst_16 = arith.constant -1.000000e+30 : f32
    %25 = vector.broadcast %cst_16 : f32 to vector<8x128xf32>
    %26 = arith.select %24, %21, %25 : vector<8x128xi1>, vector<8x128xf32>
    %cst_17 = arith.constant dense<0xFF800000> : vector<8xf32>
    %27 = vector.multi_reduction <maximumf>, %26, %cst_17 [1] : vector<8x128xf32> to vector<8xf32>
    %28 = vector.shape_cast %27 : vector<8xf32> to vector<8x1xf32>
    %29 = vector.broadcast %28 : vector<8x1xf32> to vector<8x128xf32>
    %30 = arith.subf %26, %29 : vector<8x128xf32>
    %31 = math.exp %30 : vector<8x128xf32>
    %cst_18 = arith.constant dense<0.000000e+00> : vector<8xf32>
    %32 = vector.multi_reduction <add>, %31, %cst_18 [1] : vector<8x128xf32> to vector<8xf32>
    %33 = vector.shape_cast %32 : vector<8xf32> to vector<8x1xf32>
    %34 = vector.broadcast %33 : vector<8x1xf32> to vector<8x128xf32>
    %35 = arith.divf %31, %34 : vector<8x128xf32>
    %c0_19 = arith.constant 0 : index
    %c0_20 = arith.constant 0 : index
    %c0_21 = arith.constant 0 : index
    %36 = vector.load %arg5[%c0_19, %c0_20, %c0_21] : memref<1x8x128xf32, #tpu.memory_space<vmem>>, vector<1x8x128xf32>
    %37 = vector.shape_cast %36 : vector<1x8x128xf32> to vector<8x128xf32>
    %38 = vector.shape_cast %35 : vector<8x128xf32> to vector<1x8x128xf32>
    tpu.vector_store %arg5[%c0_19, %c0_20, %c0_21], %38 {strides = array<i32>} : memref<1x8x128xf32, #tpu.memory_space<vmem>>, vector<1x8x128xf32>,
    return
  }
  func.func @transform_0(%arg0: i32, %arg1: i32) -> (i32, i32, i32) {
    %c0_i32 = arith.constant 0 : i32
    %c0_i32_0 = arith.constant 0 : i32
    return %arg0, %arg1, %c0_i32 : i32, i32, i32
  }
  func.func @transform_1(%arg0: i32, %arg1: i32) -> (i32, i32, i32) {
    %c0_i32 = arith.constant 0 : i32
    %c0_i32_0 = arith.constant 0 : i32
    %c0_i32_1 = arith.constant 0 : i32
    return %arg0, %c0_i32, %c0_i32_0 : i32, i32, i32
  }
  func.func @transform_2(%arg0: i32, %arg1: i32) -> (i32, i32) {
    %c0_i32 = arith.constant 0 : i32
    %c0_i32_0 = arith.constant 0 : i32
    %c0_i32_1 = arith.constant 0 : i32
    return %c0_i32, %c0_i32_0 : i32, i32
  }
  func.func @transform_3(%arg0: i32, %arg1: i32) -> (i32, i32, i32) {
    %c0_i32 = arith.constant 0 : i32
    %c0_i32_0 = arith.constant 0 : i32
    return %arg0, %arg1, %c0_i32 : i32, i32, i32
  }
}

</mosaic_0001>

<llo_original>
// kernel: attn_concat.1
$region0: #{attn_concat.1}
  #allocation0 [shape = 'u32[]', space=smem, size = 0x4, offset = 0x4, fixed_abs, tag = 'smem constant byte address 0x4 - core index']
  #allocation1 [shape = 'u32[144,128]{1,0:T(1,128)}', space=vmem, size = 0x12000, scoped, tag = 'internal scratch']
  %s0 = inlined_call_operand.vmem [shape: f32[2,8,32], index: 0, kind: input, shape index: {}]
  %s1 = inlined_call_operand.vmem [shape: f32[2,32,128], index: 1, kind: input, shape index: {}]
  %s2 = inlined_call_operand.vmem [shape: f32[32,1], index: 2, kind: input, shape index: {}]
  %s3 = inlined_call_operand.vmem [shape: f32[2,8,128], index: 3, kind: output, shape index: {}]
  %s4 = sld [smem:[#allocation0]]
  $region45: #{attn_concat.1} parent=0
    _
  %s6 = ssub.s32 1, %s4
  %s7 = scalar_select 0, %s6, %s4
  loop: start=0, step=1, limit=4
  $region2: #{attn_concat.1} parent=0 // loop_pre_header
    _
  $region3: #{attn_concat.1} parent=0 // loop_header
    %s9 = sphi 0, %s13
    %p10 = scmp.ge.s32.totalorder %s9, 4
    %s16 = sphi 0, %s28
    %s17 = sphi 0, %s24
    %s18 = sphi 0, %s16
    %s19 = sphi 0, %s17
    %s20 = sphi 0, %s18
    %s21 = sphi 0, %s19
    %s33 = sphi 0, %s35
    %s36 = sphi 0, %s33
    %s37 = sphi 0, %s36
    %s53 = sphi 0, %s37
    %s59 = sphi 0, %s61
    %s62 = sphi 0, %s59
    %s63 = sphi 0, %s62
    %s79 = sphi 0, %s63
    %s83 = sphi 0, %s83
    %s85 = sphi 0, %s83
    %s86 = sphi 0, %s85
    %s100 = sphi 0, %s86
    %s108 = sphi 0, %s110
    %s111 = sphi 0, %s108
    %s112 = sphi 0, %s111
    %s128 = sphi 0, %s112
  $region4: #{attn_concat.1} parent=0 // loop_header_branch
    %12 = sbr.rel (%p10) target = $region8
  $region5: #{attn_concat.1} parent=0 // loop_body
    %s14 = ssub.s32 %s9, 1
    %s15 = ssub.s32 %s9, 2
    %s22 = sadd.s32 1, %s17
    %p23 = scmp.ge.s32.totalorder %s22, 1
    %s24 = scalar_select %p23, 0, %s22
    %s25 = sadd.s32 1, %s16
    %s26 = scalar_select %p23, %s25, %s16
    %p27 = scmp.ge.s32.totalorder %s26, 2
    %s28 = scalar_select %p27, 0, %s26
    %s29 = ssub.s32 %s16, %s28
    %s30 = ssub.s32 %s17, %s24
    %s31 = sor.u32 %s29, %s30
    %p32 = scmp.eq.s32.totalorder %s31, 0
    %s34 = sadd.s32 %s33, 1
    %s35 = scalar_select %p32, %s33, %s34
    %p38 = pneg %p32
    %p39 = scmp.eq.s32.totalorder %s9, 1
    %p40 = por %p38, %p39
    %p41 = scmp.ne.s32.totalorder %s33, %s36
    %p42 = scmp.eq.s32.totalorder %s9, 0
    %p43 = por %p41, %p42
    %p44 = scmp.ne.s32.totalorder %s33, %s36
    %p45 = scmp.eq.s32.totalorder %s14, 1
    %p46 = por %p44, %p45
    %p47 = scmp.ne.s32.totalorder %s36, %s37
    %p48 = scmp.eq.s32.totalorder %s14, 0
    %p49 = por %p47, %p48
    %p50 = scmp.ne.s32.totalorder %s36, %s37
    %p51 = scmp.eq.s32.totalorder %s15, 1
    %p52 = por %p50, %p51
    %p54 = scmp.ne.s32.totalorder %s37, %s53
    %p55 = scmp.eq.s32.totalorder %s15, 0
    %p56 = por %p54, %p55
    %s57 = ssub.s32 %s16, %s28
    %p58 = scmp.eq.s32.totalorder %s57, 0
    %s60 = sadd.s32 %s59, 1
    %s61 = scalar_select %p58, %s59, %s60
    %p64 = pneg %p58
    %p65 = scmp.eq.s32.totalorder %s9, 1
    %p66 = por %p64, %p65
    %p67 = scmp.ne.s32.totalorder %s59, %s62
    %p68 = scmp.eq.s32.totalorder %s9, 0
    %p69 = por %p67, %p68
    %p70 = scmp.ne.s32.totalorder %s59, %s62
    %p71 = scmp.eq.s32.totalorder %s14, 1
    %p72 = por %p70, %p71
    %p73 = scmp.ne.s32.totalorder %s62, %s63
    %p74 = scmp.eq.s32.totalorder %s14, 0
    %p75 = por %p73, %p74
    %p76 = scmp.ne.s32.totalorder %s62, %s63
    %p77 = scmp.eq.s32.totalorder %s15, 1
    %p78 = por %p76, %p77
    %p80 = scmp.ne.s32.totalorder %s63, %s79
    %p81 = scmp.eq.s32.totalorder %s15, 0
    %p82 = por %p80, %p81
    %s84 = sadd.s32 %s83, 1
    %p87 = scmp.eq.s32.totalorder %s9, 1
    %p88 = scmp.ne.s32.totalorder %s83, %s85
    %p89 = scmp.eq.s32.totalorder %s9, 0
    %p90 = por %p88, %p89
    %p91 = scmp.ne.s32.totalorder %s83, %s85
    %p92 = scmp.eq.s32.totalorder %s14, 1
    %p93 = por %p91, %p92
    %p94 = scmp.ne.s32.totalorder %s85, %s86
    %p95 = scmp.eq.s32.totalorder %s14, 0
    %p96 = por %p94, %p95
    %p97 = scmp.ne.s32.totalorder %s85, %s86
    %p98 = scmp.eq.s32.totalorder %s15, 1
    %p99 = por %p97, %p98
    %p101 = scmp.ne.s32.totalorder %s86, %s100
    %p102 = scmp.eq.s32.totalorder %s15, 0
    %p103 = por %p101, %p102
    %s104 = ssub.s32 %s16, %s28
    %s105 = ssub.s32 %s17, %s24
    %s106 = sor.u32 %s104, %s105
    %p107 = scmp.eq.s32.totalorder %s106, 0
    %s109 = sadd.s32 %s108, 1
    %s110 = scalar_select %p107, %s108, %s109
    %p113 = pneg %p107
    %p114 = scmp.eq.s32.totalorder %s9, 1
    %p115 = por %p113, %p114
    %p116 = scmp.ne.s32.totalorder %s108, %s111
    %p117 = scmp.eq.s32.totalorder %s9, 0
    %p118 = por %p116, %p117
    %p119 = scmp.ne.s32.totalorder %s108, %s111
    %p120 = scmp.eq.s32.totalorder %s14, 1
    %p121 = por %p119, %p120
    %p122 = scmp.ne.s32.totalorder %s111, %s112
    %p123 = scmp.eq.s32.totalorder %s14, 0
    %p124 = por %p122, %p123
    %p125 = scmp.ne.s32.totalorder %s111, %s112
    %p126 = scmp.eq.s32.totalorder %s15, 1
    %p127 = por %p125, %p126
    %p129 = scmp.ne.s32.totalorder %s112, %s128
    %p130 = scmp.eq.s32.totalorder %s15, 0
    %p131 = por %p129, %p130
    %p132 = scmp.le.s32.totalorder 1, %s9
    %p133 = scmp.lt.s32.totalorder %s9, 3
    %p134 = pnand %p132, %p133
    %p135 = pneg %p134
    // Predicated region
    $region9: #{attn_concat.1} parent=5 // pred_check
      _
    $region10: #{attn_concat.1} parent=5 // pred_check_branch
      %137 = sbr.rel (%p134) target = $region12
    $region11: #{attn_concat.1} parent=5 // pred_region
      %s138 = ssub.s32 %s9, 1
      // Predicated region
      $region13: #{attn_concat.1} parent=11 // pred_check
        %p139 = pneg %p96
      $region14: #{attn_concat.1} parent=11 // pred_check_branch
        %141 = sbr.rel (%p139) target = $region16
      $region15: #{attn_concat.1} parent=11 // pred_region
        _
      $region16: #{attn_concat.1} parent=11 // pred_fallthru
        _
    $region12: #{attn_concat.1} parent=5 // pred_fallthru
      _
    %p142 = scmp.lt.s32.totalorder %s9, 2
    // Predicated region
    $region17: #{attn_concat.1} parent=5 // pred_check
      %p143 = pneg %p142
    $region18: #{attn_concat.1} parent=5 // pred_check_branch
      %145 = sbr.rel (%p143) target = $region20
    $region19: #{attn_concat.1} parent=5 // pred_region
      // Predicated region
      $region21: #{attn_concat.1} parent=19 // pred_check
        %p146 = pneg %p43
      $region22: #{attn_concat.1} parent=19 // pred_check_branch
        %148 = sbr.rel (%p146) target = $region24
      $region23: #{attn_concat.1} parent=19 // pred_region
        %p149 = scmp.lt.s32.totalorder %s16, 1
        %s150 = scalar_select %p149, %s16, 1
        %p151 = scmp.lt.s32.totalorder %s17, 0
        %s152 = scalar_select %p151, %s17, 0
        %s153 = sadd.s32 %s152, %s150
        %s154 = smul.addr %s153, 8
        %s155 = scalar_lea.vmem %s0, %s154
      $region24: #{attn_concat.1} parent=19 // pred_fallthru
        _
      // Predicated region
      $region25: #{attn_concat.1} parent=19 // pred_check
        %p156 = pneg %p69
      $region26: #{attn_concat.1} parent=19 // pred_check_branch
        %158 = sbr.rel (%p156) target = $region28
      $region27: #{attn_concat.1} parent=19 // pred_region
        %p159 = scmp.lt.s32.totalorder %s16, 1
        %s160 = scalar_select %p159, %s16, 1
        %s161 = smul.addr %s160, 4
        %s162 = smul.addr %s161, 8
        %s163 = scalar_lea.vmem %s1, %s162
      $region28: #{attn_concat.1} parent=19 // pred_fallthru
        _
    $region20: #{attn_concat.1} parent=5 // pred_fallthru
      _
    %p164 = scmp.le.s32.totalorder 1, %s9
    %p165 = scmp.lt.s32.totalorder %s9, 3
    %p166 = pnand %p164, %p165
    %p167 = pneg %p166
    // Predicated region
    $region29: #{attn_concat.1} parent=5 // pred_check
      _
    $region30: #{attn_concat.1} parent=5 // pred_check_branch
      %169 = sbr.rel (%p166) target = $region32
    $region31: #{attn_concat.1} parent=5 // pred_region
      %s170 = ssub.s32 %s9, 1
      %p171 = scmp.lt.s32.totalorder %s18, 1
      %s172 = scalar_select %p171, %s18, 1
      %p173 = scmp.lt.s32.totalorder %s19, 0
      %s174 = scalar_select %p173, %s19, 0
      %s175 = sadd.s32 %s174, %s172
      %s176 = smul.addr %s175, 8
      %s177 = scalar_lea.vmem %s0, %s176
      %p178 = pneg %p49
      %p179 = pneg %p46
      %p180 = scmp.lt.s32.totalorder %s18, 1
      %s181 = scalar_select %p180, %s18, 1
      %s182 = smul.addr %s181, 4
      %s183 = smul.addr %s182, 8
      %s184 = scalar_lea.vmem %s1, %s183
      %p185 = pneg %p75
      %p186 = pneg %p72
      %p187 = pneg %p96
      %p188 = pneg %p93
      %p189 = pneg %p124
      %p190 = pneg %p121
      %p191 = scmp.lt.s32.totalorder %s18, 1
      %s192 = scalar_select %p191, %s18, 1
      %p193 = scmp.lt.s32.totalorder %s19, 0
      %s194 = scalar_select %p193, %s19, 0
      %s195 = sadd.s32 %s194, %s192
      %s196 = smul.addr %s195, 8
      %s197 = scalar_lea.vmem %s3, %s196
      %p198 = scmp.lt.s32.totalorder %s18, 1
      %s199 = scalar_select %p198, %s18, 1
      %p200 = scmp.lt.s32.totalorder %s19, 0
      %s201 = scalar_select %p200, %s19, 0
      %s202 = sadd.s32 %s201, %s199
      %s203 = smul.addr %s202, 8
      %s204 = scalar_lea.vmem %s0, %s203
      %p205 = scmp.lt.s32.totalorder %s18, 1
      %s206 = scalar_select %p205, %s18, 1
      %s207 = smul.addr %s206, 4
      %s208 = smul.addr %s207, 8
      %s209 = scalar_lea.vmem %s1, %s208
      %p210 = scmp.lt.s32.totalorder %s18, 1
      %s211 = scalar_select %p210, %s18, 1
      %p212 = scmp.lt.s32.totalorder %s19, 0
      %s213 = scalar_select %p212, %s19, 0
      %s214 = sadd.s32 %s213, %s211
      %s215 = smul.addr %s214, 8
      %s216 = scalar_lea.vmem %s3, %s215
      %v217 = vld [vmem:[%s204] sm:$0xff]
      %v218 = vld [vmem:[%s2] sm:$0xff]
      %v219 = vld [vmem:[%s2 + $0x8] sm:$0xff]
      %v220 = vld [vmem:[%s2 + $0x10] sm:$0xff]
      %v221 = vld [vmem:[%s2 + $0x18] sm:$0xff]
      %v222 = vlaneseq
      %v223 = vshrl.u32 %v222, 7
      %v224 = vsub.s32 0, %v223
      %v225 = vrot.slane %v217, %v224
      %227 = vbcast.lane.b32.xlu0 %v225, 256
      %v228 = vpop.permute.xlu0 %227
      %s230 = sor.u32 256, 8
      %231 = vbcast.lane.b32.xlu0 %v225, %s230
      %v232 = vpop.permute.xlu0 %231
      %s234 = sor.u32 256, 16
      %235 = vbcast.lane.b32.xlu0 %v225, %s234
      %v236 = vpop.permute.xlu0 %235
      %s238 = sor.u32 256, 24
      %239 = vbcast.lane.b32.xlu0 %v225, %s238
      %v240 = vpop.permute.xlu0 %239
      %v241 = vlaneseq
      %v242 = vshrl.u32 %v241, 7
      %v243 = vsub.s32 1, %v242
      %v244 = vrot.slane %v217, %v243
      %246 = vbcast.lane.b32.xlu0 %v244, 256
      %v247 = vpop.permute.xlu0 %246
      %s249 = sor.u32 256, 8
      %250 = vbcast.lane.b32.xlu0 %v244, %s249
      %v251 = vpop.permute.xlu0 %250
      %s253 = sor.u32 256, 16
      %254 = vbcast.lane.b32.xlu0 %v244, %s253
      %v255 = vpop.permute.xlu0 %254
      %s257 = sor.u32 256, 24
      %258 = vbcast.lane.b32.xlu0 %v244, %s257
      %v259 = vpop.permute.xlu0 %258
      %v260 = vlaneseq
      %v261 = vshrl.u32 %v260, 7
      %v262 = vsub.s32 2, %v261
      %v263 = vrot.slane %v217, %v262
      %265 = vbcast.lane.b32.xlu0 %v263, 256
      %v266 = vpop.permute.xlu0 %265
      %s268 = sor.u32 256, 8
      %269 = vbcast.lane.b32.xlu0 %v263, %s268
      %v270 = vpop.permute.xlu0 %269
      %s272 = sor.u32 256, 16
      %273 = vbcast.lane.b32.xlu0 %v263, %s272
      %v274 = vpop.permute.xlu0 %273
      %s276 = sor.u32 256, 24
      %277 = vbcast.lane.b32.xlu0 %v263, %s276
      %v278 = vpop.permute.xlu0 %277
      %v279 = vlaneseq
      %v280 = vshrl.u32 %v279, 7
      %v281 = vsub.s32 3, %v280
      %v282 = vrot.slane %v217, %v281
      %284 = vbcast.lane.b32.xlu0 %v282, 256
      %v285 = vpop.permute.xlu0 %284
      %s287 = sor.u32 256, 8
      %288 = vbcast.lane.b32.xlu0 %v282, %s287
      %v289 = vpop.permute.xlu0 %288
      %s291 = sor.u32 256, 16
      %292 = vbcast.lane.b32.xlu0 %v282, %s291
      %v293 = vpop.permute.xlu0 %292
      %s295 = sor.u32 256, 24
      %296 = vbcast.lane.b32.xlu0 %v282, %s295
      %v297 = vpop.permute.xlu0 %296
      %v298 = vlaneseq
      %v299 = vshrl.u32 %v298, 7
      %v300 = vsub.s32 4, %v299
      %v301 = vrot.slane %v217, %v300
      %303 = vbcast.lane.b32.xlu0 %v301, 256
      %v304 = vpop.permute.xlu0 %303
      %s306 = sor.u32 256, 8
      %307 = vbcast.lane.b32.xlu0 %v301, %s306
      %v308 = vpop.permute.xlu0 %307
      %s310 = sor.u32 256, 16
      %311 = vbcast.lane.b32.xlu0 %v301, %s310
      %v312 = vpop.permute.xlu0 %311
      %s314 = sor.u32 256, 24
      %315 = vbcast.lane.b32.xlu0 %v301, %s314
      %v316 = vpop.permute.xlu0 %315
      %v317 = vlaneseq
      %v318 = vshrl.u32 %v317, 7
      %v319 = vsub.s32 5, %v318
      %v320 = vrot.slane %v217, %v319
      %322 = vbcast.lane.b32.xlu0 %v320, 256
      %v323 = vpop.permute.xlu0 %322
      %s325 = sor.u32 256, 8
      %326 = vbcast.lane.b32.xlu0 %v320, %s325
      %v327 = vpop.permute.xlu0 %326
      %s329 = sor.u32 256, 16
      %330 = vbcast.lane.b32.xlu0 %v320, %s329
      %v331 = vpop.permute.xlu0 %330
      %s333 = sor.u32 256, 24
      %334 = vbcast.lane.b32.xlu0 %v320, %s333
      %v335 = vpop.permute.xlu0 %334
      %v336 = vlaneseq
      %v337 = vshrl.u32 %v336, 7
      %v338 = vsub.s32 6, %v337
      %v339 = vrot.slane %v217, %v338
      %341 = vbcast.lane.b32.xlu0 %v339, 256
      %v342 = vpop.permute.xlu0 %341
      %s344 = sor.u32 256, 8
      %345 = vbcast.lane.b32.xlu0 %v339, %s344
      %v346 = vpop.permute.xlu0 %345
      %s348 = sor.u32 256, 16
      %349 = vbcast.lane.b32.xlu0 %v339, %s348
      %v350 = vpop.permute.xlu0 %349
      %s352 = sor.u32 256, 24
      %353 = vbcast.lane.b32.xlu0 %v339, %s352
      %v354 = vpop.permute.xlu0 %353
      %v355 = vlaneseq
      %v356 = vshrl.u32 %v355, 7
      %v357 = vsub.s32 7, %v356
      %v358 = vrot.slane %v217, %v357
      %360 = vbcast.lane.b32.xlu0 %v358, 256
      %v361 = vpop.permute.xlu0 %360
      %s363 = sor.u32 256, 8
      %364 = vbcast.lane.b32.xlu0 %v358, %s363
      %v365 = vpop.permute.xlu0 %364
      %s367 = sor.u32 256, 16
      %368 = vbcast.lane.b32.xlu0 %v358, %s367
      %v369 = vpop.permute.xlu0 %368
      %s371 = sor.u32 256, 24
      %372 = vbcast.lane.b32.xlu0 %v358, %s371
      %v373 = vpop.permute.xlu0 %372
      %v374 = vld [vmem:[%s209] sm:$0xff]
      %v375 = vld [vmem:[%s209 + $0x8] sm:$0xff]
      %v376 = vld [vmem:[%s209 + $0x10] sm:$0xff]
      %v377 = vld [vmem:[%s209 + $0x18] sm:$0xff]
      %v378 = vadd.f32 %v228, %v374
      %v379 = vadd.f32 %v232, %v375
      %v380 = vadd.f32 %v236, %v376
      %v381 = vadd.f32 %v240, %v377
      %v382 = vadd.f32 %v247, %v374
      %v383 = vadd.f32 %v251, %v375
      %v384 = vadd.f32 %v255, %v376
      %v385 = vadd.f32 %v259, %v377
      %v386 = vadd.f32 %v266, %v374
      %v387 = vadd.f32 %v270, %v375
      %v388 = vadd.f32 %v274, %v376
      %v389 = vadd.f32 %v278, %v377
      %v390 = vadd.f32 %v285, %v374
      %v391 = vadd.f32 %v289, %v375
      %v392 = vadd.f32 %v293, %v376
      %v393 = vadd.f32 %v297, %v377
      %v394 = vadd.f32 %v304, %v374
      %v395 = vadd.f32 %v308, %v375
      %v396 = vadd.f32 %v312, %v376
      %v397 = vadd.f32 %v316, %v377
      %v398 = vadd.f32 %v323, %v374
      %v399 = vadd.f32 %v327, %v375
      %v400 = vadd.f32 %v331, %v376
      %v401 = vadd.f32 %v335, %v377
      %v402 = vadd.f32 %v342, %v374
      %v403 = vadd.f32 %v346, %v375
      %v404 = vadd.f32 %v350, %v376
      %v405 = vadd.f32 %v354, %v377
      %v406 = vadd.f32 %v361, %v374
      %v407 = vadd.f32 %v365, %v375
      %v408 = vadd.f32 %v369, %v376
      %v409 = vadd.f32 %v373, %v377
      %v410 = vtanh.pop %v378
      %v411 = vtanh.pop %v379
      %v412 = vtanh.pop %v380
      %v413 = vtanh.pop %v381
      %v414 = vtanh.pop %v382
      %v415 = vtanh.pop %v383
      %v416 = vtanh.pop %v384
      %v417 = vtanh.pop %v385
      %v418 = vtanh.pop %v386
      %v419 = vtanh.pop %v387
      %v420 = vtanh.pop %v388
      %v421 = vtanh.pop %v389
      %v422 = vtanh.pop %v390
      %v423 = vtanh.pop %v391
      %v424 = vtanh.pop %v392
      %v425 = vtanh.pop %v393
      %v426 = vtanh.pop %v394
      %v427 = vtanh.pop %v395
      %v428 = vtanh.pop %v396
      %v429 = vtanh.pop %v397
      %v430 = vtanh.pop %v398
      %v431 = vtanh.pop %v399
      %v432 = vtanh.pop %v400
      %v433 = vtanh.pop %v401
      %v434 = vtanh.pop %v402
      %v435 = vtanh.pop %v403
      %v436 = vtanh.pop %v404
      %v437 = vtanh.pop %v405
      %v438 = vtanh.pop %v406
      %v439 = vtanh.pop %v407
      %v440 = vtanh.pop %v408
      %v441 = vtanh.pop %v409
      %443 = vset.pattern.permute.xlu0 0
      %444 = vperm.xlu0 %443, %v218
      %v445 = vpop.permute.xlu0 %444
      %448 = vset.pattern.permute.xlu0 0
      %449 = vperm.xlu0 %448, %v219
      %v450 = vpop.permute.xlu0 %449
      %453 = vset.pattern.permute.xlu0 0
      %454 = vperm.xlu0 %453, %v220
      %v455 = vpop.permute.xlu0 %454
      %458 = vset.pattern.permute.xlu0 0
      %459 = vperm.xlu0 %458, %v221
      %v460 = vpop.permute.xlu0 %459
      %v462 = vmul.f32 %v410, %v445
      %v463 = vmul.f32 %v411, %v450
      %v464 = vmul.f32 %v412, %v455
      %v465 = vmul.f32 %v413, %v460
      %v466 = vmul.f32 %v414, %v445
      %v467 = vmul.f32 %v415, %v450
      %v468 = vmul.f32 %v416, %v455
      %v469 = vmul.f32 %v417, %v460
      %v470 = vmul.f32 %v418, %v445
      %v471 = vmul.f32 %v419, %v450
      %v472 = vmul.f32 %v420, %v455
      %v473 = vmul.f32 %v421, %v460
      %v474 = vmul.f32 %v422, %v445
      %v475 = vmul.f32 %v423, %v450
      %v476 = vmul.f32 %v424, %v455
      %v477 = vmul.f32 %v425, %v460
      %v478 = vmul.f32 %v426, %v445
      %v479 = vmul.f32 %v427, %v450
      %v480 = vmul.f32 %v428, %v455
      %v481 = vmul.f32 %v429, %v460
      %v482 = vmul.f32 %v430, %v445
      %v483 = vmul.f32 %v431, %v450
      %v484 = vmul.f32 %v432, %v455
      %v485 = vmul.f32 %v433, %v460
      %v486 = vmul.f32 %v434, %v445
      %v487 = vmul.f32 %v435, %v450
      %v488 = vmul.f32 %v436, %v455
      %v489 = vmul.f32 %v437, %v460
      %v490 = vmul.f32 %v438, %v445
      %v491 = vmul.f32 %v439, %v450
      %v492 = vmul.f32 %v440, %v455
      %v493 = vmul.f32 %v441, %v460
      %v494 = vadd.f32 %v462, %v463
      %v495 = vadd.f32 %v494, %v464
      %v496 = vadd.f32 %v495, %v465
      %v497 = vrot.slane %v496, 4
      %v498 = vadd.f32 %v496, %v497
      %v499 = vrot.slane %v498, 2
      %v500 = vadd.f32 %v498, %v499
      %v501 = vrot.slane %v500, 1
      %v502 = vadd.f32 %v500, %v501
      %v503 = vadd.f32 %v466, %v467
      %v504 = vadd.f32 %v503, %v468
      %v505 = vadd.f32 %v504, %v469
      %v506 = vrot.slane %v505, 4
      %v507 = vadd.f32 %v505, %v506
      %v508 = vrot.slane %v507, 2
      %v509 = vadd.f32 %v507, %v508
      %v510 = vrot.slane %v509, 1
      %v511 = vadd.f32 %v509, %v510
      %v512 = vadd.f32 %v470, %v471
      %v513 = vadd.f32 %v512, %v472
      %v514 = vadd.f32 %v513, %v473
      %v515 = vrot.slane %v514, 4
      %v516 = vadd.f32 %v514, %v515
      %v517 = vrot.slane %v516, 2
      %v518 = vadd.f32 %v516, %v517
      %v519 = vrot.slane %v518, 1
      %v520 = vadd.f32 %v518, %v519
      %v521 = vadd.f32 %v474, %v475
      %v522 = vadd.f32 %v521, %v476
      %v523 = vadd.f32 %v522, %v477
      %v524 = vrot.slane %v523, 4
      %v525 = vadd.f32 %v523, %v524
      %v526 = vrot.slane %v525, 2
      %v527 = vadd.f32 %v525, %v526
      %v528 = vrot.slane %v527, 1
      %v529 = vadd.f32 %v527, %v528
      %v530 = vadd.f32 %v478, %v479
      %v531 = vadd.f32 %v530, %v480
      %v532 = vadd.f32 %v531, %v481
      %v533 = vrot.slane %v532, 4
      %v534 = vadd.f32 %v532, %v533
      %v535 = vrot.slane %v534, 2
      %v536 = vadd.f32 %v534, %v535
      %v537 = vrot.slane %v536, 1
      %v538 = vadd.f32 %v536, %v537
      %v539 = vadd.f32 %v482, %v483
      %v540 = vadd.f32 %v539, %v484
      %v541 = vadd.f32 %v540, %v485
      %v542 = vrot.slane %v541, 4
      %v543 = vadd.f32 %v541, %v542
      %v544 = vrot.slane %v543, 2
      %v545 = vadd.f32 %v543, %v544
      %v546 = vrot.slane %v545, 1
      %v547 = vadd.f32 %v545, %v546
      %v548 = vadd.f32 %v486, %v487
      %v549 = vadd.f32 %v548, %v488
      %v550 = vadd.f32 %v549, %v489
      %v551 = vrot.slane %v550, 4
      %v552 = vadd.f32 %v550, %v551
      %v553 = vrot.slane %v552, 2
      %v554 = vadd.f32 %v552, %v553
      %v555 = vrot.slane %v554, 1
      %v556 = vadd.f32 %v554, %v555
      %v557 = vadd.f32 %v490, %v491
      %v558 = vadd.f32 %v557, %v492
      %v559 = vadd.f32 %v558, %v493
      %v560 = vrot.slane %v559, 4
      %v561 = vadd.f32 %v559, %v560
      %v562 = vrot.slane %v561, 2
      %v563 = vadd.f32 %v561, %v562
      %v564 = vrot.slane %v563, 1
      %v565 = vadd.f32 %v563, %v564
      %vm574 = vcmask 1041409
      %v575 = vsel %vm574, %v511, %v502
      %vm576 = vcmask 1042434
      %v577 = vsel %vm576, %v520, %v575
      %vm578 = vcmask 1043459
      %v579 = vsel %vm578, %v529, %v577
      %vm580 = vcmask 1044484
      %v581 = vsel %vm580, %v538, %v579
      %vm582 = vcmask 1045509
      %v583 = vsel %vm582, %v547, %v581
      %vm584 = vcmask 1046534
      %v585 = vsel %vm584, %v556, %v583
      %vm586 = vcmask 1047559
      %v587 = vsel %vm586, %v565, %v585
      %589 = vst [vmem:[%s216] sm:$0xff] %v587
      %v590 = vld [vmem:[%s216] sm:$0xff]
      %v591 = vlaneseq
      %v592 = vand.u32 %v591, 127
      %vm593 = vcmp.lt.s32.totalorder %v592, 8
      %v594 = vsel %vm593, %v590, -1e+30
      %595 = vmax.xlane.f32.xlu0 %v594
      %v596 = vpop.xlane.xlu0 %595
      %v597 = vsub.f32 %v594, %v596
      %v598 = vmul.f32 %v597, 1.442695
      %v599 = vpow.pop %v598
      %600 = vadd.xlane.f32.xlu0 %v599
      %v601 = vpop.xlane.xlu0 %600
      %v602 = vrcp.pop %v601
      %v603 = vmul.f32 %v599, %v602
      %604 = vst [vmem:[%s216] sm:$0xff] %v603
      %p605 = scmp.lt.s32.totalorder %s18, 1
      %s606 = scalar_select %p605, %s18, 1
      %p607 = scmp.lt.s32.totalorder %s19, 0
      %s608 = scalar_select %p607, %s19, 0
      %s609 = sadd.s32 %s608, %s606
      %s610 = smul.addr %s609, 8
      %s611 = scalar_lea.vmem %s3, %s610
      // Predicated region
      $region33: #{attn_concat.1} parent=31 // pred_check
        %p612 = pneg %p121
      $region34: #{attn_concat.1} parent=31 // pred_check_branch
        %614 = sbr.rel (%p612) target = $region36
      $region35: #{attn_concat.1} parent=31 // pred_region
        _
      $region36: #{attn_concat.1} parent=31 // pred_fallthru
        _
    $region32: #{attn_concat.1} parent=5 // pred_fallthru
      _
    %p615 = scmp.le.s32.totalorder 2, %s9
    // Predicated region
    $region37: #{attn_concat.1} parent=5 // pred_check
      %p616 = pneg %p615
    $region38: #{attn_concat.1} parent=5 // pred_check_branch
      %618 = sbr.rel (%p616) target = $region40
    $region39: #{attn_concat.1} parent=5 // pred_region
      %s619 = ssub.s32 %s9, 2
      // Predicated region
      $region41: #{attn_concat.1} parent=39 // pred_check
        %p620 = pneg %p127
      $region42: #{attn_concat.1} parent=39 // pred_check_branch
        %622 = sbr.rel (%p620) target = $region44
      $region43: #{attn_concat.1} parent=39 // pred_region
        %p623 = scmp.lt.s32.totalorder %s20, 1
        %s624 = scalar_select %p623, %s20, 1
        %p625 = scmp.lt.s32.totalorder %s21, 0
        %s626 = scalar_select %p625, %s21, 0
        %s627 = sadd.s32 %s626, %s624
        %s628 = smul.addr %s627, 8
        %s629 = scalar_lea.vmem %s3, %s628
      $region44: #{attn_concat.1} parent=39 // pred_fallthru
        _
    $region40: #{attn_concat.1} parent=5 // pred_fallthru
      _
  $region6: #{attn_concat.1} parent=0 // loop_footer
    %s13 = sadd.s32 1, %s9
  $region7: #{attn_concat.1} parent=0 // loop_footer_branch
    %8 = sbr.rel target = $region3
  $region8: #{attn_concat.1} parent=0 // loop_exit
    _

</llo_original>
